<compile_context>
chip_gen: v5e
topology: v5e:2x2
jax: 0.10.0
libtpu: 0.0.40
codegen_flags: <defaults>
</compile_context>

<pallas_src>
import functools

import jax
import jax.numpy as jnp
from jax.experimental import pallas as pl
from jax.experimental.pallas import tpu as pltpu


def _mha_tail(get_head, x_resid, wo_ref, bo_ref, gamma_ref, beta_ref,
              out_ref, atted_ref, num_heads, dim_head):
    """Shared per-batch-element: attention -> projection -> residual -> LayerNorm."""
    # Per-head attention.  Static head loop; scores via dot_general contracting
    # the last dim of both operands (no explicit k.T).
    dn = (((1,), (1,)), ((), ()))
    for h in range(num_heads):
        qh, kh, vh = get_head(h)                       # (Nq, dh), (Nk, dh), (Nk, dh)
        s = jax.lax.dot_general(qh, kh, dn,
                                preferred_element_type=jnp.float32)    # (Nq, Nk)
        s = s - jnp.max(s, axis=-1, keepdims=True)
        p = jnp.exp(s)
        # Softmax divide on the EUP (approx reciprocal) instead of the VALU.
        p = p * pl.reciprocal(jnp.sum(p, axis=-1, keepdims=True), approx=True)
        # Write this head's output directly into the (Nq, inner) scratch slab
        # (no jnp.concatenate of per-head results).
        atted_ref[:, h * dim_head:(h + 1) * dim_head] = jnp.dot(
            p, vh, preferred_element_type=jnp.float32)

    # Output projection (Linear with bias).  Dropout rate = 0.0 -> identity.
    # TODO(synk): dropout (rate 0.0 in this module) is not applied in-kernel.
    proj = jnp.dot(atted_ref[...], wo_ref[...],
                   preferred_element_type=jnp.float32) + bo_ref[0]

    # Residual + LayerNorm (eps = 1e-5, biased variance, as in PyTorch).
    resid = proj + x_resid
    mean = jnp.mean(resid, axis=-1, keepdims=True)
    var = jnp.mean((resid - mean) ** 2, axis=-1, keepdims=True)
    normed = (resid - mean) * jax.lax.rsqrt(var + 1e-5)
    out = normed * gamma_ref[0] + beta_ref[0]
    out_ref[...] = out[None].astype(out_ref.dtype)


def bot_mha_self_kernel(num_heads, dim_head,
                        x_ref, wqkv_ref, wo_ref, bo_ref, gamma_ref, beta_ref,
                        out_ref, atted_ref):
    """Self-attention path (k_s = v_s = q_s): single fused QKV matmul."""
    inner = num_heads * dim_head
    x = x_ref[0]                                              # (N, D)
    # One MXU pass for all of Q, K, V; the softmax scale is already baked into
    # the q columns of the fused weight.
    qkv = jnp.dot(x, wqkv_ref[...], preferred_element_type=jnp.float32)   # (N, 3*inner)

    def get_head(h):
        lo = h * dim_head
        return (qkv[:, lo:lo + dim_head],
                qkv[:, inner + lo:inner + lo + dim_head],
                qkv[:, 2 * inner + lo:2 * inner + lo + dim_head])

    _mha_tail(get_head, x, wo_ref, bo_ref, gamma_ref, beta_ref,
              out_ref, atted_ref, num_heads, dim_head)


def bot_mha_cross_kernel(num_heads, dim_head,
                         xq_ref, xk_ref, xv_ref, wqkv_ref, wo_ref, bo_ref,
                         gamma_ref, beta_ref, out_ref, atted_ref):
    """General path: distinct q_s / k_s / v_s inputs."""
    inner = num_heads * dim_head
    xq = xq_ref[0]                                            # (Nq, D)
    xk = xk_ref[0]                                            # (Nk, D)
    xv = xv_ref[0]                                            # (Nk, D)
    # TODO(synk): when k_s is v_s, the K and V projections could share one matmul.
    q = jnp.dot(xq, wqkv_ref[:, :inner], preferred_element_type=jnp.float32)
    k = jnp.dot(xk, wqkv_ref[:, inner:2 * inner], preferred_element_type=jnp.float32)
    v = jnp.dot(xv, wqkv_ref[:, 2 * inner:], preferred_element_type=jnp.float32)

    def get_head(h):
        sl = slice(h * dim_head, (h + 1) * dim_head)
        return q[:, sl], k[:, sl], v[:, sl]

    _mha_tail(get_head, xq, wo_ref, bo_ref, gamma_ref, beta_ref,
              out_ref, atted_ref, num_heads, dim_head)


def fuse_qkv_params(raw_params, dim_head):
    """One-time parameter prep: concatenate wq|wk|wv into a (D, 3*inner) weight
    and bake the softmax scale (dim_head**-0.5) into the q columns."""
    scale = dim_head ** (-0.5)
    wqkv = jnp.concatenate(
        [raw_params["wq"] * scale, raw_params["wk"], raw_params["wv"]], axis=1)
    return {"wqkv": wqkv,
            "wo": raw_params["wo"], "bo": raw_params["bo"],
            "gamma": raw_params["gamma"], "beta": raw_params["beta"]}


def bot_multi_head_attention(q_s, k_s=None, v_s=None, pos_emb=None, *,
                             params, num_heads, dim_head):
    # Mirrors the PyTorch forward's None handling.
    if pos_emb is not None:
        # TODO(synk): relative-position (pos_emb) attention term not implemented.
        raise NotImplementedError("pos_emb path is not supported")
    if k_s is None and v_s is None:
        k_s = v_s = q_s
    elif v_s is None:
        v_s = k_s

    B, Nq, D = q_s.shape
    inner = num_heads * dim_head

    def seq_spec(n):
        return pl.BlockSpec((1, n, D), lambda b: (b, 0, 0))

    def full2(shape):
        # Constant index_map: the (small) weight block is identical for every
        # grid step.  (pipeline_mode=pl.Buffered(1) would also drop the second
        # buffer; left at the default for portability.)
        return pl.BlockSpec(shape, lambda b: (0, 0))

    weight_args = (params["wqkv"], params["wo"], params["bo"],
                   params["gamma"], params["beta"])
    weight_specs = [full2((D, 3 * inner)), full2((inner, D)),
                    full2((1, D)), full2((1, D)), full2((1, D))]
    common = dict(
        out_shape=jax.ShapeDtypeStruct((B, Nq, D), q_s.dtype),
        grid=(B,),
        out_specs=seq_spec(Nq),
        scratch_shapes=[pltpu.VMEM((Nq, inner), jnp.float32)],
        compiler_params=pltpu.CompilerParams(
            dimension_semantics=("parallel",)),
    )

    if k_s is q_s and v_s is q_s:
        kernel = functools.partial(bot_mha_self_kernel, num_heads, dim_head)
        return pl.pallas_call(
            kernel, in_specs=[seq_spec(Nq)] + weight_specs, **common,
        )(q_s, *weight_args)

    Nk = k_s.shape[1]
    assert v_s.shape[1] == Nk, "k_s and v_s must share a sequence length"
    kernel = functools.partial(bot_mha_cross_kernel, num_heads, dim_head)
    return pl.pallas_call(
        kernel, in_specs=[seq_spec(Nq), seq_spec(Nk), seq_spec(Nk)] + weight_specs,
        **common,
    )(q_s, k_s, v_s, *weight_args)


def reference_forward(q_s, k_s, v_s, raw_params, num_heads, dim_head):
    """Pure-JAX reference of the PyTorch forward (no pos_emb)."""
    B, Nq, D = q_s.shape
    Nk = k_s.shape[1]
    inner = num_heads * dim_head
    scale = dim_head ** (-0.5)
    q = q_s @ raw_params["wq"]
    k = k_s @ raw_params["wk"]
    v = v_s @ raw_params["wv"]

    def split_heads(t, n):   # b n (h d) -> b h n d
        return t.reshape(B, n, num_heads, dim_head).transpose(0, 2, 1, 3)

    qh, kh, vh = split_heads(q, Nq), split_heads(k, Nk), split_heads(v, Nk)
    att = jnp.einsum("bhid,bhjd->bhij", qh, kh) * scale
    att = jax.nn.softmax(att, axis=-1)
    atted = jnp.einsum("bhij,bhjd->bhid", att, vh)
    atted = atted.transpose(0, 2, 1, 3).reshape(B, Nq, inner)
    proj = atted @ raw_params["wo"] + raw_params["bo"][0]
    resid = proj + q_s
    mean = jnp.mean(resid, axis=-1, keepdims=True)
    var = jnp.mean((resid - mean) ** 2, axis=-1, keepdims=True)
    normed = (resid - mean) / jnp.sqrt(var + 1e-5)
    return normed * raw_params["gamma"][0] + raw_params["beta"][0]


if __name__ == "__main__":
    B, N, D = 2, 8, 32
    num_heads = 8
    dim_head = D // num_heads          # 4
    inner = num_heads * dim_head       # 32

    key = jax.random.PRNGKey(0)
    kx, kc, kq, kk, kv, ko, kb, kg, kbt = jax.random.split(key, 9)

    q_s = jax.random.normal(kx, (B, N, D), dtype=jnp.float32)
    kv_s = jax.random.normal(kc, (B, N, D), dtype=jnp.float32)   # cross-attn memory

    raw_params = {
        "wq": jax.random.normal(kq, (D, inner), dtype=jnp.float32) * 0.1,
        "wk": jax.random.normal(kk, (D, inner), dtype=jnp.float32) * 0.1,
        "wv": jax.random.normal(kv, (D, inner), dtype=jnp.float32) * 0.1,
        "wo": jax.random.normal(ko, (inner, D), dtype=jnp.float32) * 0.1,
        "bo": jax.random.normal(kb, (1, D), dtype=jnp.float32) * 0.1,
        "gamma": 1.0 + 0.1 * jax.random.normal(kg, (1, D), dtype=jnp.float32),
        "beta": 0.1 * jax.random.normal(kbt, (1, D), dtype=jnp.float32),
    }
    params = fuse_qkv_params(raw_params, dim_head)

    # Self-attention path (k_s = v_s = q_s), the default module call.
    out = bot_multi_head_attention(q_s, params=params,
                                   num_heads=num_heads, dim_head=dim_head)
    out = jax.block_until_ready(out)
    ref = reference_forward(q_s, q_s, q_s, raw_params, num_heads, dim_head)
    assert out.shape == (B, N, D)
    # Tolerance accounts for the EUP approximate reciprocal in the softmax.
    assert jnp.allclose(out, ref, rtol=1e-2, atol=1e-2), "self-attention mismatch"

    # Cross-attention path (k_s given, v_s defaults to k_s), as in forward(q, k).
    out_x = bot_multi_head_attention(q_s, kv_s, params=params,
                                     num_heads=num_heads, dim_head=dim_head)
    out_x = jax.block_until_ready(out_x)
    ref_x = reference_forward(q_s, kv_s, kv_s, raw_params, num_heads, dim_head)
    assert jnp.allclose(out_x, ref_x, rtol=1e-2, atol=1e-2), "cross-attention mismatch"

    print("KERNEL_OK")
</pallas_src>

<mosaic_0001>
module attributes {stable_mosaic.version = 11 : i64} {
  func.func @bot_mha_self_kernel(%arg0: i32, %arg1: memref<1x8x32xf32, #tpu.memory_space<vmem>>, %arg2: memref<32x96xf32, #tpu.memory_space<vmem>>, %arg3: memref<32x32xf32, #tpu.memory_space<vmem>>, %arg4: memref<1x32xf32, #tpu.memory_space<vmem>>, %arg5: memref<1x32xf32, #tpu.memory_space<vmem>>, %arg6: memref<1x32xf32, #tpu.memory_space<vmem>>, %arg7: memref<1x8x32xf32, #tpu.memory_space<vmem>>, %arg8: memref<8x32xf32, #tpu.memory_space<vmem>>) attributes {dimension_semantics = [#tpu.dimension_semantics<parallel>], iteration_bounds = array<i64: 2>, scalar_prefetch = 0 : i64, scratch_operands = 1 : i64, tpu.core_type = #tpu.core_type<tc>, window_params = [{transform_indices = @transform_0, window_bounds = array<i64: 1, 8, 32>}, {pipeline_mode = #tpu.pipeline_mode<synchronous>, transform_indices = @transform_1, window_bounds = array<i64: 32, 96>}, {pipeline_mode = #tpu.pipeline_mode<synchronous>, transform_indices = @transform_2, window_bounds = array<i64: 32, 32>}, {pipeline_mode = #tpu.pipeline_mode<synchronous>, transform_indices = @transform_3, window_bounds = array<i64: 1, 32>}, {pipeline_mode = #tpu.pipeline_mode<synchronous>, transform_indices = @transform_4, window_bounds = array<i64: 1, 32>}, {pipeline_mode = #tpu.pipeline_mode<synchronous>, transform_indices = @transform_5, window_bounds = array<i64: 1, 32>}, {transform_indices = @transform_6, window_bounds = array<i64: 1, 8, 32>}]} {
    %c0 = arith.constant 0 : index
    %c0_0 = arith.constant 0 : index
    %c0_1 = arith.constant 0 : index
    %0 = vector.load %arg1[%c0, %c0_0, %c0_1] : memref<1x8x32xf32, #tpu.memory_space<vmem>>, vector<1x8x32xf32>
    %1 = vector.shape_cast %0 : vector<1x8x32xf32> to vector<8x32xf32>
    %c0_2 = arith.constant 0 : index
    %c0_3 = arith.constant 0 : index
    %2 = vector.load %arg2[%c0_2, %c0_3] : memref<32x96xf32, #tpu.memory_space<vmem>>, vector<32x96xf32>
    %cst = arith.constant dense<0.000000e+00> : vector<8x96xf32>
    %3 = tpu.matmul %1, %2, %cst {dimension_numbers = #tpu.dot_dimension_numbers<[1], [0], [0], [1], [0, 0, 1, 1], [], []>} : vector<8x32xf32>, vector<32x96xf32>, vector<8x96xf32> -> vector<8x96xf32>
    %4 = vector.extract_strided_slice %3 {offsets = [0, 0], sizes = [8, 4], strides = [1, 1]} : vector<8x96xf32> to vector<8x4xf32>
    %5 = vector.extract_strided_slice %3 {offsets = [0, 32], sizes = [8, 4], strides = [1, 1]} : vector<8x96xf32> to vector<8x4xf32>
    %6 = vector.extract_strided_slice %3 {offsets = [0, 64], sizes = [8, 4], strides = [1, 1]} : vector<8x96xf32> to vector<8x4xf32>
    %cst_4 = arith.constant dense<0.000000e+00> : vector<8x8xf32>
    %7 = tpu.matmul %4, %5, %cst_4 {dimension_numbers = #tpu.dot_dimension_numbers<[1], [1], [0], [0], [0, 0, 1, 0], [], []>} : vector<8x4xf32>, vector<8x4xf32>, vector<8x8xf32> -> vector<8x8xf32>
    %cst_5 = arith.constant dense<0xFF800000> : vector<8xf32>
    %8 = vector.multi_reduction <maximumf>, %7, %cst_5 [1] : vector<8x8xf32> to vector<8xf32>
    %9 = vector.shape_cast %8 : vector<8xf32> to vector<8x1xf32>
    %10 = vector.broadcast %9 : vector<8x1xf32> to vector<8x8xf32>
    %11 = arith.subf %7, %10 : vector<8x8xf32>
    %12 = math.exp %11 : vector<8x8xf32>
    %cst_6 = arith.constant dense<0.000000e+00> : vector<8xf32>
    %13 = vector.multi_reduction <add>, %12, %cst_6 [1] : vector<8x8xf32> to vector<8xf32>
    %14 = vector.shape_cast %13 : vector<8xf32> to vector<8x1xf32>
    %15 = tpu.reciprocal %14 {approx = true} : vector<8x1xf32> -> vector<8x1xf32>
    %16 = vector.broadcast %15 : vector<8x1xf32> to vector<8x8xf32>
    %17 = arith.mulf %12, %16 : vector<8x8xf32>
    %cst_7 = arith.constant dense<0.000000e+00> : vector<8x4xf32>
    %18 = tpu.matmul %17, %6, %cst_7 {dimension_numbers = #tpu.dot_dimension_numbers<[1], [0], [0], [1], [0, 0, 1, 1], [], []>} : vector<8x8xf32>, vector<8x4xf32>, vector<8x4xf32> -> vector<8x4xf32>
    %c0_8 = arith.constant 0 : index
    %c0_9 = arith.constant 0 : index
    %19 = vector.load %arg8[%c0_8, %c0_9] : memref<8x32xf32, #tpu.memory_space<vmem>>, vector<8x4xf32>
    tpu.vector_store %arg8[%c0_8, %c0_9], %18 {strides = array<i32>} : memref<8x32xf32, #tpu.memory_space<vmem>>, vector<8x4xf32>,
    %20 = vector.extract_strided_slice %3 {offsets = [0, 4], sizes = [8, 4], strides = [1, 1]} : vector<8x96xf32> to vector<8x4xf32>
    %21 = vector.extract_strided_slice %3 {offsets = [0, 36], sizes = [8, 4], strides = [1, 1]} : vector<8x96xf32> to vector<8x4xf32>
    %22 = vector.extract_strided_slice %3 {offsets = [0, 68], sizes = [8, 4], strides = [1, 1]} : vector<8x96xf32> to vector<8x4xf32>
    %cst_10 = arith.constant dense<0.000000e+00> : vector<8x8xf32>
    %23 = tpu.matmul %20, %21, %cst_10 {dimension_numbers = #tpu.dot_dimension_numbers<[1], [1], [0], [0], [0, 0, 1, 0], [], []>} : vector<8x4xf32>, vector<8x4xf32>, vector<8x8xf32> -> vector<8x8xf32>
    %cst_11 = arith.constant dense<0xFF800000> : vector<8xf32>
    %24 = vector.multi_reduction <maximumf>, %23, %cst_11 [1] : vector<8x8xf32> to vector<8xf32>
    %25 = vector.shape_cast %24 : vector<8xf32> to vector<8x1xf32>
    %26 = vector.broadcast %25 : vector<8x1xf32> to vector<8x8xf32>
    %27 = arith.subf %23, %26 : vector<8x8xf32>
    %28 = math.exp %27 : vector<8x8xf32>
    %cst_12 = arith.constant dense<0.000000e+00> : vector<8xf32>
    %29 = vector.multi_reduction <add>, %28, %cst_12 [1] : vector<8x8xf32> to vector<8xf32>
    %30 = vector.shape_cast %29 : vector<8xf32> to vector<8x1xf32>
    %31 = tpu.reciprocal %30 {approx = true} : vector<8x1xf32> -> vector<8x1xf32>
    %32 = vector.broadcast %31 : vector<8x1xf32> to vector<8x8xf32>
    %33 = arith.mulf %28, %32 : vector<8x8xf32>
    %cst_13 = arith.constant dense<0.000000e+00> : vector<8x4xf32>
    %34 = tpu.matmul %33, %22, %cst_13 {dimension_numbers = #tpu.dot_dimension_numbers<[1], [0], [0], [1], [0, 0, 1, 1], [], []>} : vector<8x8xf32>, vector<8x4xf32>, vector<8x4xf32> -> vector<8x4xf32>
    %c0_14 = arith.constant 0 : index
    %c4 = arith.constant 4 : index
    %35 = vector.load %arg8[%c0_14, %c4] : memref<8x32xf32, #tpu.memory_space<vmem>>, vector<8x4xf32>
    tpu.vector_store %arg8[%c0_14, %c4], %34 {strides = array<i32>} : memref<8x32xf32, #tpu.memory_space<vmem>>, vector<8x4xf32>,
    %36 = vector.extract_strided_slice %3 {offsets = [0, 8], sizes = [8, 4], strides = [1, 1]} : vector<8x96xf32> to vector<8x4xf32>
    %37 = vector.extract_strided_slice %3 {offsets = [0, 40], sizes = [8, 4], strides = [1, 1]} : vector<8x96xf32> to vector<8x4xf32>
    %38 = vector.extract_strided_slice %3 {offsets = [0, 72], sizes = [8, 4], strides = [1, 1]} : vector<8x96xf32> to vector<8x4xf32>
    %cst_15 = arith.constant dense<0.000000e+00> : vector<8x8xf32>
    %39 = tpu.matmul %36, %37, %cst_15 {dimension_numbers = #tpu.dot_dimension_numbers<[1], [1], [0], [0], [0, 0, 1, 0], [], []>} : vector<8x4xf32>, vector<8x4xf32>, vector<8x8xf32> -> vector<8x8xf32>
    %cst_16 = arith.constant dense<0xFF800000> : vector<8xf32>
    %40 = vector.multi_reduction <maximumf>, %39, %cst_16 [1] : vector<8x8xf32> to vector<8xf32>
    %41 = vector.shape_cast %40 : vector<8xf32> to vector<8x1xf32>
    %42 = vector.broadcast %41 : vector<8x1xf32> to vector<8x8xf32>
    %43 = arith.subf %39, %42 : vector<8x8xf32>
    %44 = math.exp %43 : vector<8x8xf32>
    %cst_17 = arith.constant dense<0.000000e+00> : vector<8xf32>
    %45 = vector.multi_reduction <add>, %44, %cst_17 [1] : vector<8x8xf32> to vector<8xf32>
    %46 = vector.shape_cast %45 : vector<8xf32> to vector<8x1xf32>
    %47 = tpu.reciprocal %46 {approx = true} : vector<8x1xf32> -> vector<8x1xf32>
    %48 = vector.broadcast %47 : vector<8x1xf32> to vector<8x8xf32>
    %49 = arith.mulf %44, %48 : vector<8x8xf32>
    %cst_18 = arith.constant dense<0.000000e+00> : vector<8x4xf32>
    %50 = tpu.matmul %49, %38, %cst_18 {dimension_numbers = #tpu.dot_dimension_numbers<[1], [0], [0], [1], [0, 0, 1, 1], [], []>} : vector<8x8xf32>, vector<8x4xf32>, vector<8x4xf32> -> vector<8x4xf32>
    %c0_19 = arith.constant 0 : index
    %c8 = arith.constant 8 : index
    %51 = vector.load %arg8[%c0_19, %c8] : memref<8x32xf32, #tpu.memory_space<vmem>>, vector<8x4xf32>
    tpu.vector_store %arg8[%c0_19, %c8], %50 {strides = array<i32>} : memref<8x32xf32, #tpu.memory_space<vmem>>, vector<8x4xf32>,
    %52 = vector.extract_strided_slice %3 {offsets = [0, 12], sizes = [8, 4], strides = [1, 1]} : vector<8x96xf32> to vector<8x4xf32>
    %53 = vector.extract_strided_slice %3 {offsets = [0, 44], sizes = [8, 4], strides = [1, 1]} : vector<8x96xf32> to vector<8x4xf32>
    %54 = vector.extract_strided_slice %3 {offsets = [0, 76], sizes = [8, 4], strides = [1, 1]} : vector<8x96xf32> to vector<8x4xf32>
    %cst_20 = arith.constant dense<0.000000e+00> : vector<8x8xf32>
    %55 = tpu.matmul %52, %53, %cst_20 {dimension_numbers = #tpu.dot_dimension_numbers<[1], [1], [0], [0], [0, 0, 1, 0], [], []>} : vector<8x4xf32>, vector<8x4xf32>, vector<8x8xf32> -> vector<8x8xf32>
    %cst_21 = arith.constant dense<0xFF800000> : vector<8xf32>
    %56 = vector.multi_reduction <maximumf>, %55, %cst_21 [1] : vector<8x8xf32> to vector<8xf32>
    %57 = vector.shape_cast %56 : vector<8xf32> to vector<8x1xf32>
    %58 = vector.broadcast %57 : vector<8x1xf32> to vector<8x8xf32>
    %59 = arith.subf %55, %58 : vector<8x8xf32>
    %60 = math.exp %59 : vector<8x8xf32>
    %cst_22 = arith.constant dense<0.000000e+00> : vector<8xf32>
    %61 = vector.multi_reduction <add>, %60, %cst_22 [1] : vector<8x8xf32> to vector<8xf32>
    %62 = vector.shape_cast %61 : vector<8xf32> to vector<8x1xf32>
    %63 = tpu.reciprocal %62 {approx = true} : vector<8x1xf32> -> vector<8x1xf32>
    %64 = vector.broadcast %63 : vector<8x1xf32> to vector<8x8xf32>
    %65 = arith.mulf %60, %64 : vector<8x8xf32>
    %cst_23 = arith.constant dense<0.000000e+00> : vector<8x4xf32>
    %66 = tpu.matmul %65, %54, %cst_23 {dimension_numbers = #tpu.dot_dimension_numbers<[1], [0], [0], [1], [0, 0, 1, 1], [], []>} : vector<8x8xf32>, vector<8x4xf32>, vector<8x4xf32> -> vector<8x4xf32>
    %c0_24 = arith.constant 0 : index
    %c12 = arith.constant 12 : index
    %67 = vector.load %arg8[%c0_24, %c12] : memref<8x32xf32, #tpu.memory_space<vmem>>, vector<8x4xf32>
    tpu.vector_store %arg8[%c0_24, %c12], %66 {strides = array<i32>} : memref<8x32xf32, #tpu.memory_space<vmem>>, vector<8x4xf32>,
    %68 = vector.extract_strided_slice %3 {offsets = [0, 16], sizes = [8, 4], strides = [1, 1]} : vector<8x96xf32> to vector<8x4xf32>
    %69 = vector.extract_strided_slice %3 {offsets = [0, 48], sizes = [8, 4], strides = [1, 1]} : vector<8x96xf32> to vector<8x4xf32>
    %70 = vector.extract_strided_slice %3 {offsets = [0, 80], sizes = [8, 4], strides = [1, 1]} : vector<8x96xf32> to vector<8x4xf32>
    %cst_25 = arith.constant dense<0.000000e+00> : vector<8x8xf32>
    %71 = tpu.matmul %68, %69, %cst_25 {dimension_numbers = #tpu.dot_dimension_numbers<[1], [1], [0], [0], [0, 0, 1, 0], [], []>} : vector<8x4xf32>, vector<8x4xf32>, vector<8x8xf32> -> vector<8x8xf32>
    %cst_26 = arith.constant dense<0xFF800000> : vector<8xf32>
    %72 = vector.multi_reduction <maximumf>, %71, %cst_26 [1] : vector<8x8xf32> to vector<8xf32>
    %73 = vector.shape_cast %72 : vector<8xf32> to vector<8x1xf32>
    %74 = vector.broadcast %73 : vector<8x1xf32> to vector<8x8xf32>
    %75 = arith.subf %71, %74 : vector<8x8xf32>
    %76 = math.exp %75 : vector<8x8xf32>
    %cst_27 = arith.constant dense<0.000000e+00> : vector<8xf32>
    %77 = vector.multi_reduction <add>, %76, %cst_27 [1] : vector<8x8xf32> to vector<8xf32>
    %78 = vector.shape_cast %77 : vector<8xf32> to vector<8x1xf32>
    %79 = tpu.reciprocal %78 {approx = true} : vector<8x1xf32> -> vector<8x1xf32>
    %80 = vector.broadcast %79 : vector<8x1xf32> to vector<8x8xf32>
    %81 = arith.mulf %76, %80 : vector<8x8xf32>
    %cst_28 = arith.constant dense<0.000000e+00> : vector<8x4xf32>
    %82 = tpu.matmul %81, %70, %cst_28 {dimension_numbers = #tpu.dot_dimension_numbers<[1], [0], [0], [1], [0, 0, 1, 1], [], []>} : vector<8x8xf32>, vector<8x4xf32>, vector<8x4xf32> -> vector<8x4xf32>
    %c0_29 = arith.constant 0 : index
    %c16 = arith.constant 16 : index
    %83 = vector.load %arg8[%c0_29, %c16] : memref<8x32xf32, #tpu.memory_space<vmem>>, vector<8x4xf32>
    tpu.vector_store %arg8[%c0_29, %c16], %82 {strides = array<i32>} : memref<8x32xf32, #tpu.memory_space<vmem>>, vector<8x4xf32>,
    %84 = vector.extract_strided_slice %3 {offsets = [0, 20], sizes = [8, 4], strides = [1, 1]} : vector<8x96xf32> to vector<8x4xf32>
    %85 = vector.extract_strided_slice %3 {offsets = [0, 52], sizes = [8, 4], strides = [1, 1]} : vector<8x96xf32> to vector<8x4xf32>
    %86 = vector.extract_strided_slice %3 {offsets = [0, 84], sizes = [8, 4], strides = [1, 1]} : vector<8x96xf32> to vector<8x4xf32>
    %cst_30 = arith.constant dense<0.000000e+00> : vector<8x8xf32>
    %87 = tpu.matmul %84, %85, %cst_30 {dimension_numbers = #tpu.dot_dimension_numbers<[1], [1], [0], [0], [0, 0, 1, 0], [], []>} : vector<8x4xf32>, vector<8x4xf32>, vector<8x8xf32> -> vector<8x8xf32>
    %cst_31 = arith.constant dense<0xFF800000> : vector<8xf32>
    %88 = vector.multi_reduction <maximumf>, %87, %cst_31 [1] : vector<8x8xf32> to vector<8xf32>
    %89 = vector.shape_cast %88 : vector<8xf32> to vector<8x1xf32>
    %90 = vector.broadcast %89 : vector<8x1xf32> to vector<8x8xf32>
    %91 = arith.subf %87, %90 : vector<8x8xf32>
    %92 = math.exp %91 : vector<8x8xf32>
    %cst_32 = arith.constant dense<0.000000e+00> : vector<8xf32>
    %93 = vector.multi_reduction <add>, %92, %cst_32 [1] : vector<8x8xf32> to vector<8xf32>
    %94 = vector.shape_cast %93 : vector<8xf32> to vector<8x1xf32>
    %95 = tpu.reciprocal %94 {approx = true} : vector<8x1xf32> -> vector<8x1xf32>
    %96 = vector.broadcast %95 : vector<8x1xf32> to vector<8x8xf32>
    %97 = arith.mulf %92, %96 : vector<8x8xf32>
    %cst_33 = arith.constant dense<0.000000e+00> : vector<8x4xf32>
    %98 = tpu.matmul %97, %86, %cst_33 {dimension_numbers = #tpu.dot_dimension_numbers<[1], [0], [0], [1], [0, 0, 1, 1], [], []>} : vector<8x8xf32>, vector<8x4xf32>, vector<8x4xf32> -> vector<8x4xf32>
    %c0_34 = arith.constant 0 : index
    %c20 = arith.constant 20 : index
    %99 = vector.load %arg8[%c0_34, %c20] : memref<8x32xf32, #tpu.memory_space<vmem>>, vector<8x4xf32>
    tpu.vector_store %arg8[%c0_34, %c20], %98 {strides = array<i32>} : memref<8x32xf32, #tpu.memory_space<vmem>>, vector<8x4xf32>,
    %100 = vector.extract_strided_slice %3 {offsets = [0, 24], sizes = [8, 4], strides = [1, 1]} : vector<8x96xf32> to vector<8x4xf32>
    %101 = vector.extract_strided_slice %3 {offsets = [0, 56], sizes = [8, 4], strides = [1, 1]} : vector<8x96xf32> to vector<8x4xf32>
    %102 = vector.extract_strided_slice %3 {offsets = [0, 88], sizes = [8, 4], strides = [1, 1]} : vector<8x96xf32> to vector<8x4xf32>
    %cst_35 = arith.constant dense<0.000000e+00> : vector<8x8xf32>
    %103 = tpu.matmul %100, %101, %cst_35 {dimension_numbers = #tpu.dot_dimension_numbers<[1], [1], [0], [0], [0, 0, 1, 0], [], []>} : vector<8x4xf32>, vector<8x4xf32>, vector<8x8xf32> -> vector<8x8xf32>
    %cst_36 = arith.constant dense<0xFF800000> : vector<8xf32>
    %104 = vector.multi_reduction <maximumf>, %103, %cst_36 [1] : vector<8x8xf32> to vector<8xf32>
    %105 = vector.shape_cast %104 : vector<8xf32> to vector<8x1xf32>
    %106 = vector.broadcast %105 : vector<8x1xf32> to vector<8x8xf32>
    %107 = arith.subf %103, %106 : vector<8x8xf32>
    %108 = math.exp %107 : vector<8x8xf32>
    %cst_37 = arith.constant dense<0.000000e+00> : vector<8xf32>
    %109 = vector.multi_reduction <add>, %108, %cst_37 [1] : vector<8x8xf32> to vector<8xf32>
    %110 = vector.shape_cast %109 : vector<8xf32> to vector<8x1xf32>
    %111 = tpu.reciprocal %110 {approx = true} : vector<8x1xf32> -> vector<8x1xf32>
    %112 = vector.broadcast %111 : vector<8x1xf32> to vector<8x8xf32>
    %113 = arith.mulf %108, %112 : vector<8x8xf32>
    %cst_38 = arith.constant dense<0.000000e+00> : vector<8x4xf32>
    %114 = tpu.matmul %113, %102, %cst_38 {dimension_numbers = #tpu.dot_dimension_numbers<[1], [0], [0], [1], [0, 0, 1, 1], [], []>} : vector<8x8xf32>, vector<8x4xf32>, vector<8x4xf32> -> vector<8x4xf32>
    %c0_39 = arith.constant 0 : index
    %c24 = arith.constant 24 : index
    %115 = vector.load %arg8[%c0_39, %c24] : memref<8x32xf32, #tpu.memory_space<vmem>>, vector<8x4xf32>
    tpu.vector_store %arg8[%c0_39, %c24], %114 {strides = array<i32>} : memref<8x32xf32, #tpu.memory_space<vmem>>, vector<8x4xf32>,
    %116 = vector.extract_strided_slice %3 {offsets = [0, 28], sizes = [8, 4], strides = [1, 1]} : vector<8x96xf32> to vector<8x4xf32>
    %117 = vector.extract_strided_slice %3 {offsets = [0, 60], sizes = [8, 4], strides = [1, 1]} : vector<8x96xf32> to vector<8x4xf32>
    %118 = vector.extract_strided_slice %3 {offsets = [0, 92], sizes = [8, 4], strides = [1, 1]} : vector<8x96xf32> to vector<8x4xf32>
    %cst_40 = arith.constant dense<0.000000e+00> : vector<8x8xf32>
    %119 = tpu.matmul %116, %117, %cst_40 {dimension_numbers = #tpu.dot_dimension_numbers<[1], [1], [0], [0], [0, 0, 1, 0], [], []>} : vector<8x4xf32>, vector<8x4xf32>, vector<8x8xf32> -> vector<8x8xf32>
    %cst_41 = arith.constant dense<0xFF800000> : vector<8xf32>
    %120 = vector.multi_reduction <maximumf>, %119, %cst_41 [1] : vector<8x8xf32> to vector<8xf32>
    %121 = vector.shape_cast %120 : vector<8xf32> to vector<8x1xf32>
    %122 = vector.broadcast %121 : vector<8x1xf32> to vector<8x8xf32>
    %123 = arith.subf %119, %122 : vector<8x8xf32>
    %124 = math.exp %123 : vector<8x8xf32>
    %cst_42 = arith.constant dense<0.000000e+00> : vector<8xf32>
    %125 = vector.multi_reduction <add>, %124, %cst_42 [1] : vector<8x8xf32> to vector<8xf32>
    %126 = vector.shape_cast %125 : vector<8xf32> to vector<8x1xf32>
    %127 = tpu.reciprocal %126 {approx = true} : vector<8x1xf32> -> vector<8x1xf32>
    %128 = vector.broadcast %127 : vector<8x1xf32> to vector<8x8xf32>
    %129 = arith.mulf %124, %128 : vector<8x8xf32>
    %cst_43 = arith.constant dense<0.000000e+00> : vector<8x4xf32>
    %130 = tpu.matmul %129, %118, %cst_43 {dimension_numbers = #tpu.dot_dimension_numbers<[1], [0], [0], [1], [0, 0, 1, 1], [], []>} : vector<8x8xf32>, vector<8x4xf32>, vector<8x4xf32> -> vector<8x4xf32>
    %c0_44 = arith.constant 0 : index
    %c28 = arith.constant 28 : index
    %131 = vector.load %arg8[%c0_44, %c28] : memref<8x32xf32, #tpu.memory_space<vmem>>, vector<8x4xf32>
    tpu.vector_store %arg8[%c0_44, %c28], %130 {strides = array<i32>} : memref<8x32xf32, #tpu.memory_space<vmem>>, vector<8x4xf32>,
    %c0_45 = arith.constant 0 : index
    %c0_46 = arith.constant 0 : index
    %132 = vector.load %arg8[%c0_45, %c0_46] : memref<8x32xf32, #tpu.memory_space<vmem>>, vector<8x32xf32>
    %c0_47 = arith.constant 0 : index
    %c0_48 = arith.constant 0 : index
    %133 = vector.load %arg3[%c0_47, %c0_48] : memref<32x32xf32, #tpu.memory_space<vmem>>, vector<32x32xf32>
    %cst_49 = arith.constant dense<0.000000e+00> : vector<8x32xf32>
    %134 = tpu.matmul %132, %133, %cst_49 {dimension_numbers = #tpu.dot_dimension_numbers<[1], [0], [0], [1], [0, 0, 1, 1], [], []>} : vector<8x32xf32>, vector<32x32xf32>, vector<8x32xf32> -> vector<8x32xf32>
    %c0_50 = arith.constant 0 : index
    %c0_51 = arith.constant 0 : index
    %135 = vector.load %arg4[%c0_50, %c0_51] : memref<1x32xf32, #tpu.memory_space<vmem>>, vector<1x32xf32>
    %136 = vector.shape_cast %135 : vector<1x32xf32> to vector<32xf32>
    %137 = vector.shape_cast %136 : vector<32xf32> to vector<1x32xf32>
    %138 = vector.broadcast %137 : vector<1x32xf32> to vector<8x32xf32>
    %139 = arith.addf %134, %138 : vector<8x32xf32>
    %140 = arith.addf %139, %1 : vector<8x32xf32>
    %cst_52 = arith.constant dense<0.000000e+00> : vector<8xf32>
    %141 = vector.multi_reduction <add>, %140, %cst_52 [1] : vector<8x32xf32> to vector<8xf32>
    %142 = vector.shape_cast %141 : vector<8xf32> to vector<8x1xf32>
    %cst_53 = arith.constant 3.200000e+01 : f32
    %143 = vector.broadcast %cst_53 : f32 to vector<8x1xf32>
    %144 = arith.divf %142, %143 : vector<8x1xf32>
    %145 = vector.broadcast %144 : vector<8x1xf32> to vector<8x32xf32>
    %146 = arith.subf %140, %145 : vector<8x32xf32>
    %147 = arith.mulf %146, %146 : vector<8x32xf32>
    %cst_54 = arith.constant dense<0.000000e+00> : vector<8xf32>
    %148 = vector.multi_reduction <add>, %147, %cst_54 [1] : vector<8x32xf32> to vector<8xf32>
    %149 = vector.shape_cast %148 : vector<8xf32> to vector<8x1xf32>
    %cst_55 = arith.constant 3.200000e+01 : f32
    %150 = vector.broadcast %cst_55 : f32 to vector<8x1xf32>
    %151 = arith.divf %149, %150 : vector<8x1xf32>
    %152 = vector.broadcast %144 : vector<8x1xf32> to vector<8x32xf32>
    %153 = arith.subf %140, %152 : vector<8x32xf32>
    %cst_56 = arith.constant 9.99999974E-6 : f32
    %154 = vector.broadcast %cst_56 : f32 to vector<8x1xf32>
    %155 = arith.addf %151, %154 : vector<8x1xf32>
    %156 = math.rsqrt %155 : vector<8x1xf32>
    %157 = vector.broadcast %156 : vector<8x1xf32> to vector<8x32xf32>
    %158 = arith.mulf %153, %157 : vector<8x32xf32>
    %c0_57 = arith.constant 0 : index
    %c0_58 = arith.constant 0 : index
    %159 = vector.load %arg5[%c0_57, %c0_58] : memref<1x32xf32, #tpu.memory_space<vmem>>, vector<1x32xf32>
    %160 = vector.shape_cast %159 : vector<1x32xf32> to vector<32xf32>
    %161 = vector.shape_cast %160 : vector<32xf32> to vector<1x32xf32>
    %162 = vector.broadcast %161 : vector<1x32xf32> to vector<8x32xf32>
    %163 = arith.mulf %158, %162 : vector<8x32xf32>
    %c0_59 = arith.constant 0 : index
    %c0_60 = arith.constant 0 : index
    %164 = vector.load %arg6[%c0_59, %c0_60] : memref<1x32xf32, #tpu.memory_space<vmem>>, vector<1x32xf32>
    %165 = vector.shape_cast %164 : vector<1x32xf32> to vector<32xf32>
    %166 = vector.shape_cast %165 : vector<32xf32> to vector<1x32xf32>
    %167 = vector.broadcast %166 : vector<1x32xf32> to vector<8x32xf32>
    %168 = arith.addf %163, %167 : vector<8x32xf32>
    %169 = vector.shape_cast %168 : vector<8x32xf32> to vector<1x8x32xf32>
    %c0_61 = arith.constant 0 : index
    %c0_62 = arith.constant 0 : index
    %c0_63 = arith.constant 0 : index
    %170 = vector.load %arg7[%c0_61, %c0_62, %c0_63] : memref<1x8x32xf32, #tpu.memory_space<vmem>>, vector<1x8x32xf32>
    tpu.vector_store %arg7[%c0_61, %c0_62, %c0_63], %169 {strides = array<i32>} : memref<1x8x32xf32, #tpu.memory_space<vmem>>, vector<1x8x32xf32>,
    return
  }
  func.func @transform_0(%arg0: i32) -> (i32, i32, i32) {
    %c0_i32 = arith.constant 0 : i32
    %c0_i32_0 = arith.constant 0 : i32
    %c0_i32_1 = arith.constant 0 : i32
    return %arg0, %c0_i32, %c0_i32_0 : i32, i32, i32
  }
  func.func @transform_1(%arg0: i32) -> (i32, i32) {
    %c0_i32 = arith.constant 0 : i32
    %c0_i32_0 = arith.constant 0 : i32
    %c0_i32_1 = arith.constant 0 : i32
    return %c0_i32, %c0_i32_0 : i32, i32
  }
  func.func @transform_2(%arg0: i32) -> (i32, i32) {
    %c0_i32 = arith.constant 0 : i32
    %c0_i32_0 = arith.constant 0 : i32
    %c0_i32_1 = arith.constant 0 : i32
    return %c0_i32, %c0_i32_0 : i32, i32
  }
  func.func @transform_3(%arg0: i32) -> (i32, i32) {
    %c0_i32 = arith.constant 0 : i32
    %c0_i32_0 = arith.constant 0 : i32
    %c0_i32_1 = arith.constant 0 : i32
    return %c0_i32, %c0_i32_0 : i32, i32
  }
  func.func @transform_4(%arg0: i32) -> (i32, i32) {
    %c0_i32 = arith.constant 0 : i32
    %c0_i32_0 = arith.constant 0 : i32
    %c0_i32_1 = arith.constant 0 : i32
    return %c0_i32, %c0_i32_0 : i32, i32
  }
  func.func @transform_5(%arg0: i32) -> (i32, i32) {
    %c0_i32 = arith.constant 0 : i32
    %c0_i32_0 = arith.constant 0 : i32
    %c0_i32_1 = arith.constant 0 : i32
    return %c0_i32, %c0_i32_0 : i32, i32
  }
  func.func @transform_6(%arg0: i32) -> (i32, i32, i32) {
    %c0_i32 = arith.constant 0 : i32
    %c0_i32_0 = arith.constant 0 : i32
    %c0_i32_1 = arith.constant 0 : i32
    return %arg0, %c0_i32, %c0_i32_0 : i32, i32, i32
  }
}

</mosaic_0001>

<llo_original>
// kernel: tpu_custom_call.1
$region0: #{tpu_custom_call.1}
  #allocation0 [shape = 'u32[]', space=smem, size = 0x4, offset = 0x4, fixed_abs, tag = 'smem constant byte address 0x4 - core index']
  #allocation1 [shape = 'u32[72,128]{1,0:T(1,128)}', space=vmem, size = 0x9000, scoped, tag = 'internal scratch']
  #allocation2 [shape = 'f32[8,32]{1,0:T(8,128)}', space=vmem, size = 0x1000, scoped, tag = 'scratch operand']
  %s0 = inlined_call_operand.hbm [shape: f32[2,8,32], index: 0, kind: input, shape index: {}]
  %s1 = inlined_call_operand.hbm [shape: f32[32,96], index: 1, kind: input, shape index: {}]
  %s2 = inlined_call_operand.hbm [shape: f32[32,32], index: 2, kind: input, shape index: {}]
  %s3 = inlined_call_operand.vmem [shape: f32[1,32], index: 3, kind: input, shape index: {}]
  %s4 = inlined_call_operand.vmem [shape: f32[1,32], index: 4, kind: input, shape index: {}]
  %s5 = inlined_call_operand.vmem [shape: f32[1,32], index: 5, kind: input, shape index: {}]
  %s6 = inlined_call_operand.hbm [shape: f32[2,8,32], index: 6, kind: output, shape index: {}]
  %s7 = sld [smem:[#allocation0]]
  $region69: #{tpu_custom_call.1} parent=0
    _
  %s9 = ssub.s32 1, %s7
  %s10 = scalar_select 0, %s9, %s7
  $region1: #{tpu_custom_call.1} parent=0
    #allocation3 [shape = 'u8[8192]{0}', space=vmem, size = 0x2000, scoped, tag = 'input window, operand 0']
    #allocation4 [shape = 's32[2]{0}', space=sflag, size = 0x8, scoped, tag = 'scoped memory for tpu_custom_call.1']
    #allocation5 [shape = 's32[2]{0}', space=sflag, size = 0x8, scoped, tag = 'scoped memory for tpu_custom_call.1']
    #allocation6 [shape = 'u8[16384]{0}', space=vmem, size = 0x4000, scoped, tag = 'input window, operand 1, single buffered']
    #allocation7 [shape = 's32[1]{0}', space=sflag, size = 0x4, scoped, tag = 'scoped memory for tpu_custom_call.1']
    #allocation8 [shape = 'u8[16384]{0}', space=vmem, size = 0x4000, scoped, tag = 'input window, operand 2, single buffered']
    #allocation9 [shape = 'u8[8192]{0}', space=vmem, size = 0x2000, scoped, tag = 'output window, operand 0']
    %11 = vsyncpa [#allocation4], 0
    %s12 = scalar_lea.sflag [#allocation4], 1
    %13 = vsyncpa %s12, 0
    %14 = vsyncpa [#allocation7], 0
    %15 = vsyncpa [#allocation5], 0
    %s16 = scalar_lea.sflag [#allocation5], 1
    %17 = vsyncpa %s16, 0
    loop: start=0, step=1, limit=4
    $region2: #{tpu_custom_call.1} parent=1 // loop_pre_header
      _
    $region3: #{tpu_custom_call.1} parent=1 // loop_header
      %s19 = sphi 0, %s23
      %p20 = scmp.ge.s32.totalorder %s19, 4
      %s29 = sphi 0, %s31
      %s32 = sphi 0, %s29
      %s33 = sphi 0, %s32
      %s49 = sphi 0, %s33
      %s53 = sphi 0, %s53
      %s55 = sphi 0, %s53
      %s56 = sphi 0, %s55
      %s70 = sphi 0, %s56
      %s74 = sphi 0, %s74
      %s76 = sphi 0, %s74
      %s77 = sphi 0, %s76
      %s91 = sphi 0, %s77
      %s95 = sphi 0, %s95
      %s97 = sphi 0, %s95
      %s98 = sphi 0, %s97
      %s112 = sphi 0, %s98
      %s116 = sphi 0, %s116
      %s118 = sphi 0, %s116
      %s119 = sphi 0, %s118
      %s133 = sphi 0, %s119
      %s137 = sphi 0, %s137
      %s139 = sphi 0, %s137
      %s140 = sphi 0, %s139
      %s154 = sphi 0, %s140
      %s160 = sphi 0, %s162
      %s163 = sphi 0, %s160
      %s164 = sphi 0, %s163
      %s180 = sphi 0, %s164
    $region4: #{tpu_custom_call.1} parent=1 // loop_header_branch
      %22 = sbr.rel (%p20) target = $region8
    $region5: #{tpu_custom_call.1} parent=1 // loop_body
      %s24 = ssub.s32 %s19, 1
      %s25 = ssub.s32 %s19, 2
      %s26 = sadd.s32 %s19, 1
      %s27 = ssub.s32 %s19, %s26
      %p28 = scmp.eq.s32.totalorder %s27, 0
      %s30 = sadd.s32 %s29, 1
      %s31 = scalar_select %p28, %s29, %s30
      %p34 = pneg %p28
      %p35 = scmp.eq.s32.totalorder %s19, 1
      %p36 = por %p34, %p35
      %p37 = scmp.ne.s32.totalorder %s29, %s32
      %p38 = scmp.eq.s32.totalorder %s19, 0
      %p39 = por %p37, %p38
      %p40 = scmp.ne.s32.totalorder %s29, %s32
      %p41 = scmp.eq.s32.totalorder %s24, 1
      %p42 = por %p40, %p41
      %p43 = scmp.ne.s32.totalorder %s32, %s33
      %p44 = scmp.eq.s32.totalorder %s24, 0
      %p45 = por %p43, %p44
      %p46 = scmp.ne.s32.totalorder %s32, %s33
      %p47 = scmp.eq.s32.totalorder %s25, 1
      %p48 = por %p46, %p47
      %p50 = scmp.ne.s32.totalorder %s33, %s49
      %p51 = scmp.eq.s32.totalorder %s25, 0
      %p52 = por %p50, %p51
      %s54 = sadd.s32 %s53, 1
      %p57 = scmp.eq.s32.totalorder %s19, 1
      %p58 = scmp.ne.s32.totalorder %s53, %s55
      %p59 = scmp.eq.s32.totalorder %s19, 0
      %p60 = por %p58, %p59
      %p61 = scmp.ne.s32.totalorder %s53, %s55
      %p62 = scmp.eq.s32.totalorder %s24, 1
      %p63 = por %p61, %p62
      %p64 = scmp.ne.s32.totalorder %s55, %s56
      %p65 = scmp.eq.s32.totalorder %s24, 0
      %p66 = por %p64, %p65
      %p67 = scmp.ne.s32.totalorder %s55, %s56
      %p68 = scmp.eq.s32.totalorder %s25, 1
      %p69 = por %p67, %p68
      %p71 = scmp.ne.s32.totalorder %s56, %s70
      %p72 = scmp.eq.s32.totalorder %s25, 0
      %p73 = por %p71, %p72
      %s75 = sadd.s32 %s74, 1
      %p78 = scmp.eq.s32.totalorder %s19, 1
      %p79 = scmp.ne.s32.totalorder %s74, %s76
      %p80 = scmp.eq.s32.totalorder %s19, 0
      %p81 = por %p79, %p80
      %p82 = scmp.ne.s32.totalorder %s74, %s76
      %p83 = scmp.eq.s32.totalorder %s24, 1
      %p84 = por %p82, %p83
      %p85 = scmp.ne.s32.totalorder %s76, %s77
      %p86 = scmp.eq.s32.totalorder %s24, 0
      %p87 = por %p85, %p86
      %p88 = scmp.ne.s32.totalorder %s76, %s77
      %p89 = scmp.eq.s32.totalorder %s25, 1
      %p90 = por %p88, %p89
      %p92 = scmp.ne.s32.totalorder %s77, %s91
      %p93 = scmp.eq.s32.totalorder %s25, 0
      %p94 = por %p92, %p93
      %s96 = sadd.s32 %s95, 1
      %p99 = scmp.eq.s32.totalorder %s19, 1
      %p100 = scmp.ne.s32.totalorder %s95, %s97
      %p101 = scmp.eq.s32.totalorder %s19, 0
      %p102 = por %p100, %p101
      %p103 = scmp.ne.s32.totalorder %s95, %s97
      %p104 = scmp.eq.s32.totalorder %s24, 1
      %p105 = por %p103, %p104
      %p106 = scmp.ne.s32.totalorder %s97, %s98
      %p107 = scmp.eq.s32.totalorder %s24, 0
      %p108 = por %p106, %p107
      %p109 = scmp.ne.s32.totalorder %s97, %s98
      %p110 = scmp.eq.s32.totalorder %s25, 1
      %p111 = por %p109, %p110
      %p113 = scmp.ne.s32.totalorder %s98, %s112
      %p114 = scmp.eq.s32.totalorder %s25, 0
      %p115 = por %p113, %p114
      %s117 = sadd.s32 %s116, 1
      %p120 = scmp.eq.s32.totalorder %s19, 1
      %p121 = scmp.ne.s32.totalorder %s116, %s118
      %p122 = scmp.eq.s32.totalorder %s19, 0
      %p123 = por %p121, %p122
      %p124 = scmp.ne.s32.totalorder %s116, %s118
      %p125 = scmp.eq.s32.totalorder %s24, 1
      %p126 = por %p124, %p125
      %p127 = scmp.ne.s32.totalorder %s118, %s119
      %p128 = scmp.eq.s32.totalorder %s24, 0
      %p129 = por %p127, %p128
      %p130 = scmp.ne.s32.totalorder %s118, %s119
      %p131 = scmp.eq.s32.totalorder %s25, 1
      %p132 = por %p130, %p131
      %p134 = scmp.ne.s32.totalorder %s119, %s133
      %p135 = scmp.eq.s32.totalorder %s25, 0
      %p136 = por %p134, %p135
      %s138 = sadd.s32 %s137, 1
      %p141 = scmp.eq.s32.totalorder %s19, 1
      %p142 = scmp.ne.s32.totalorder %s137, %s139
      %p143 = scmp.eq.s32.totalorder %s19, 0
      %p144 = por %p142, %p143
      %p145 = scmp.ne.s32.totalorder %s137, %s139
      %p146 = scmp.eq.s32.totalorder %s24, 1
      %p147 = por %p145, %p146
      %p148 = scmp.ne.s32.totalorder %s139, %s140
      %p149 = scmp.eq.s32.totalorder %s24, 0
      %p150 = por %p148, %p149
      %p151 = scmp.ne.s32.totalorder %s139, %s140
      %p152 = scmp.eq.s32.totalorder %s25, 1
      %p153 = por %p151, %p152
      %p155 = scmp.ne.s32.totalorder %s140, %s154
      %p156 = scmp.eq.s32.totalorder %s25, 0
      %p157 = por %p155, %p156
      %s158 = ssub.s32 %s19, %s26
      %p159 = scmp.eq.s32.totalorder %s158, 0
      %s161 = sadd.s32 %s160, 1
      %s162 = scalar_select %p159, %s160, %s161
      %p165 = pneg %p159
      %p166 = scmp.eq.s32.totalorder %s19, 1
      %p167 = por %p165, %p166
      %p168 = scmp.ne.s32.totalorder %s160, %s163
      %p169 = scmp.eq.s32.totalorder %s19, 0
      %p170 = por %p168, %p169
      %p171 = scmp.ne.s32.totalorder %s160, %s163
      %p172 = scmp.eq.s32.totalorder %s24, 1
      %p173 = por %p171, %p172
      %p174 = scmp.ne.s32.totalorder %s163, %s164
      %p175 = scmp.eq.s32.totalorder %s24, 0
      %p176 = por %p174, %p175
      %p177 = scmp.ne.s32.totalorder %s163, %s164
      %p178 = scmp.eq.s32.totalorder %s25, 1
      %p179 = por %p177, %p178
      %p181 = scmp.ne.s32.totalorder %s164, %s180
      %p182 = scmp.eq.s32.totalorder %s25, 0
      %p183 = por %p181, %p182
      %p184 = scmp.le.s32.totalorder 1, %s19
      %p185 = scmp.lt.s32.totalorder %s19, 3
      %p186 = pnand %p184, %p185
      %p187 = pneg %p186
      // Predicated region
      $region9: #{tpu_custom_call.1} parent=5 // pred_check
        _
      $region10: #{tpu_custom_call.1} parent=5 // pred_check_branch
        %189 = sbr.rel (%p186) target = $region12
      $region11: #{tpu_custom_call.1} parent=5 // pred_region
        %s190 = ssub.s32 %s19, 1
        // Predicated region
        $region13: #{tpu_custom_call.1} parent=11 // pred_check
          %p191 = pneg %p66
        $region14: #{tpu_custom_call.1} parent=11 // pred_check_branch
          %193 = sbr.rel (%p191) target = $region16
        $region15: #{tpu_custom_call.1} parent=11 // pred_region
          %195 = vsyncadd [#allocation7], 0
          %s196 = sshll.u32 %s1, 4
          %s197 = int_to_ptr.hbm [resolvable:$true] %s196
          %s198 = sshll.u32 [#allocation6], 4
          %s199 = int_to_ptr.vmem [resolvable:$true] %s198
          %204 = dma.hbm_to_vmem [thread:$0]  %s197, 512, %s199, [#allocation7], 128, 128, 8
        $region16: #{tpu_custom_call.1} parent=11 // pred_fallthru
          _
        // Predicated region
        $region17: #{tpu_custom_call.1} parent=11 // pred_check
          %p205 = pneg %p87
        $region18: #{tpu_custom_call.1} parent=11 // pred_check_branch
          %207 = sbr.rel (%p205) target = $region20
        $region19: #{tpu_custom_call.1} parent=11 // pred_region
          %209 = vsyncadd [#allocation7], 0
          %s210 = sshll.u32 %s2, 4
          %s211 = int_to_ptr.hbm [resolvable:$true] %s210
          %s212 = sshll.u32 [#allocation8], 4
          %s213 = int_to_ptr.vmem [resolvable:$true] %s212
          %218 = dma.hbm_to_vmem [thread:$0]  %s211, 512, %s213, [#allocation7], 128, 128, 8
        $region20: #{tpu_custom_call.1} parent=11 // pred_fallthru
          _
        // Predicated region
        $region21: #{tpu_custom_call.1} parent=11 // pred_check
          %p219 = pneg %p108
        $region22: #{tpu_custom_call.1} parent=11 // pred_check_branch
          %221 = sbr.rel (%p219) target = $region24
        $region23: #{tpu_custom_call.1} parent=11 // pred_region
          _
        $region24: #{tpu_custom_call.1} parent=11 // pred_fallthru
          _
        // Predicated region
        $region25: #{tpu_custom_call.1} parent=11 // pred_check
          %p222 = pneg %p129
        $region26: #{tpu_custom_call.1} parent=11 // pred_check_branch
          %224 = sbr.rel (%p222) target = $region28
        $region27: #{tpu_custom_call.1} parent=11 // pred_region
          _
        $region28: #{tpu_custom_call.1} parent=11 // pred_fallthru
          _
        // Predicated region
        $region29: #{tpu_custom_call.1} parent=11 // pred_check
          %p225 = pneg %p150
        $region30: #{tpu_custom_call.1} parent=11 // pred_check_branch
          %227 = sbr.rel (%p225) target = $region32
        $region31: #{tpu_custom_call.1} parent=11 // pred_region
          _
        $region32: #{tpu_custom_call.1} parent=11 // pred_fallthru
          _
      $region12: #{tpu_custom_call.1} parent=5 // pred_fallthru
        _
      %p228 = scmp.lt.s32.totalorder %s19, 2
      // Predicated region
      $region33: #{tpu_custom_call.1} parent=5 // pred_check
        %p229 = pneg %p228
      $region34: #{tpu_custom_call.1} parent=5 // pred_check_branch
        %231 = sbr.rel (%p229) target = $region36
      $region35: #{tpu_custom_call.1} parent=5 // pred_region
        // Predicated region
        $region37: #{tpu_custom_call.1} parent=35 // pred_check
          %p232 = pneg %p39
        $region38: #{tpu_custom_call.1} parent=35 // pred_check_branch
          %234 = sbr.rel (%p232) target = $region40
        $region39: #{tpu_custom_call.1} parent=35 // pred_region
          %s235 = sand.u32 %s29, 1
          %s236 = scalar_lea.sflag [#allocation4], %s235
          %s237 = sand.u32 %s29, 1
          %s238 = smul.addr %s237, 8
          %s239 = scalar_lea.vmem [#allocation3], %s238
          %241 = vsyncadd %s236, 0
          %s242 = smul.addr %s19, 8
          %s243 = scalar_lea.hbm %s0, %s242
          %s245 = sshll.u32 %s243, 4
          %s246 = int_to_ptr.hbm [resolvable:$true] %s245
          %s247 = sshll.u32 %s239, 4
          %s248 = int_to_ptr.vmem [resolvable:$true] %s247
          %250 = dma.hbm_to_vmem [thread:$0]  %s246, 128, %s248, %s236
        $region40: #{tpu_custom_call.1} parent=35 // pred_fallthru
          _
      $region36: #{tpu_custom_call.1} parent=5 // pred_fallthru
        _
      %p251 = scmp.le.s32.totalorder 1, %s19
      %p252 = scmp.lt.s32.totalorder %s19, 3
      %p253 = pnand %p251, %p252
      %p254 = pneg %p253
      // Predicated region
      $region41: #{tpu_custom_call.1} parent=5 // pred_check
        _
      $region42: #{tpu_custom_call.1} parent=5 // pred_check_branch
        %256 = sbr.rel (%p253) target = $region44
      $region43: #{tpu_custom_call.1} parent=5 // pred_region
        %s257 = ssub.s32 %s19, 1
        %s258 = sand.u32 %s32, 1
        %s259 = scalar_lea.sflag [#allocation4], %s258
        %s260 = sand.u32 %s32, 1
        %s261 = smul.addr %s260, 8
        %s262 = scalar_lea.vmem [#allocation3], %s261
        // Predicated region
        $region45: #{tpu_custom_call.1} parent=43 // pred_check
          %p263 = pneg %p45
        $region46: #{tpu_custom_call.1} parent=43 // pred_check_branch
          %265 = sbr.rel (%p263) target = $region48
        $region47: #{tpu_custom_call.1} parent=43 // pred_region
          %267 = dma.done %s259, 128
        $region48: #{tpu_custom_call.1} parent=43 // pred_fallthru
          _
        // Predicated region
        $region49: #{tpu_custom_call.1} parent=43 // pred_check
          %p268 = pneg %p66
        $region50: #{tpu_custom_call.1} parent=43 // pred_check_branch
          %270 = sbr.rel (%p268) target = $region52
        $region51: #{tpu_custom_call.1} parent=43 // pred_region
          %272 = dma.done [#allocation7], 512
        $region52: #{tpu_custom_call.1} parent=43 // pred_fallthru
          _
        // Predicated region
        $region53: #{tpu_custom_call.1} parent=43 // pred_check
          %p273 = pneg %p87
        $region54: #{tpu_custom_call.1} parent=43 // pred_check_branch
          %275 = sbr.rel (%p273) target = $region56
        $region55: #{tpu_custom_call.1} parent=43 // pred_region
          %277 = dma.done [#allocation7], 512
        $region56: #{tpu_custom_call.1} parent=43 // pred_fallthru
          _
        %s278 = sand.u32 %s32, 1
        %s279 = scalar_lea.sflag [#allocation4], %s278
        %s280 = sand.u32 %s32, 1
        %s281 = smul.addr %s280, 8
        %s282 = scalar_lea.vmem [#allocation3], %s281
        %p283 = pneg %p45
        %p284 = pneg %p42
        %p285 = pneg %p66
        %p286 = pneg %p63
        %p287 = pneg %p87
        %p288 = pneg %p84
        %p289 = pneg %p108
        %p290 = pneg %p105
        %p291 = pneg %p129
        %p292 = pneg %p126
        %p293 = pneg %p150
        %p294 = pneg %p147
        %p295 = pneg %p176
        %p296 = pneg %p173
        %s297 = sand.u32 %s163, 1
        %s298 = scalar_lea.sflag [#allocation5], %s297
        %s299 = sand.u32 %s163, 1
        %s300 = smul.addr %s299, 8
        %s301 = scalar_lea.vmem [#allocation9], %s300
        %v302 = vld [vmem:[%s262] sm:$0xff]
        %v303 = vld [vmem:[#allocation6] sm:$0xff]
        %v304 = vld [vmem:[#allocation6 + $0x8] sm:$0xff]
        %v305 = vld [vmem:[#allocation6 + $0x10] sm:$0xff]
        %v306 = vld [vmem:[#allocation6 + $0x18] sm:$0xff]
        %vm307 = vcmask 261120
        %v309 = vsel %vm307, %v302, 0
        %311 = vmatpush.msra.mxu0 0.0
        %312 = vmatpush.msra.mxu0 0.0
        %313 = vmatpush.msra.mxu0 0.0
        %314 = vmatpush.msra.mxu0 0.0
        %315 = vmatpush.msra.mxu0 0.0
        %316 = vmatpush.msra.mxu0 0.0
        %317 = vmatpush.msra.mxu0 0.0
        %318 = vmatpush.msra.mxu0 0.0
        %319 = vmatpush.msra.mxu0 0.0
        %320 = vmatpush.msra.mxu0 0.0
        %321 = vmatpush.msra.mxu0 0.0
        %322 = vmatpush.msra.mxu0 0.0
        %323 = vmatpush.msra.mxu0 %v306
        %324 = vmatpush.msra.mxu0 %v305
        %325 = vmatpush.msra.mxu0 %v304
        %326 = vmatpush.msra.mxu0 %v303
        %327 = vmatmul.f32.gmra.mxu0 %v309
        %v328 = vpop.f32.mrf.mxu0
        %v329 = vadd.f32 0.0, %v328
        %330 = vdwg.mxu0
        %332 = vrot.lane.b32.xlu0 %v329, 96
        %v333 = vpop.permute.xlu0 %332
        %vm334 = vcmask 31744
        %v335 = vsel %vm334, %v329, 0
        %v337 = vsel %vm334, %v333, 0
        %339 = vmatpush.xpose.msra.mxu0 0.0
        %340 = vmatpush.xpose.msra.mxu0 0.0
        %341 = vmatpush.xpose.msra.mxu0 0.0
        %342 = vmatpush.xpose.msra.mxu0 0.0
        %343 = vmatpush.xpose.msra.mxu0 0.0
        %344 = vmatpush.xpose.msra.mxu0 0.0
        %345 = vmatpush.xpose.msra.mxu0 0.0
        %346 = vmatpush.xpose.msra.mxu0 0.0
        %347 = vmatpush.xpose.msra.mxu0 0.0
        %348 = vmatpush.xpose.msra.mxu0 0.0
        %349 = vmatpush.xpose.msra.mxu0 0.0
        %350 = vmatpush.xpose.msra.mxu0 0.0
        %351 = vmatpush.xpose.msra.mxu0 0.0
        %352 = vmatpush.xpose.msra.mxu0 0.0
        %353 = vmatpush.xpose.msra.mxu0 0.0
        %354 = vmatpush.xpose.msra.mxu0 %v337
        %355 = vmatmul.f32.gmra.mxu0 %v335
        %v356 = vpop.f32.mrf.mxu0
        %v357 = vadd.f32 0.0, %v356
        %358 = vdwg.mxu0
        %vm359 = vcmask 64512
        %v360 = vsel %vm359, %v357, -inf
        %361 = vmax.xlane.f32.xlu0 %v360
        %v362 = vpop.xlane.xlu0 %361
        %v363 = vsub.f32 %v357, %v362
        %v364 = vmul.f32 %v363, 1.442695
        %v365 = vpow.pop %v364
        %v366 = vsel %vm359, %v365, 0.0
        %367 = vadd.xlane.f32.xlu0 %v366
        %v368 = vpop.xlane.xlu0 %367
        %v369 = vrcp.pop %v368
        %v370 = vmul.f32 %v365, %v369
        %371 = vrot.lane.b32.xlu0 %v329, 64
        %v372 = vpop.permute.xlu0 %371
        %v375 = vsel %vm359, %v370, 0
        %377 = vmatpush.msra.mxu0 0.0
        %378 = vmatpush.msra.mxu0 0.0
        %379 = vmatpush.msra.mxu0 0.0
        %380 = vmatpush.msra.mxu0 0.0
        %381 = vmatpush.msra.mxu0 0.0
        %382 = vmatpush.msra.mxu0 0.0
        %383 = vmatpush.msra.mxu0 0.0
        %384 = vmatpush.msra.mxu0 0.0
        %385 = vmatpush.msra.mxu0 0.0
        %386 = vmatpush.msra.mxu0 0.0
        %387 = vmatpush.msra.mxu0 0.0
        %388 = vmatpush.msra.mxu0 0.0
        %389 = vmatpush.msra.mxu0 0.0
        %390 = vmatpush.msra.mxu0 0.0
        %391 = vmatpush.msra.mxu0 0.0
        %392 = vmatpush.msra.mxu0 %v372
        %393 = vmatmul.f32.gmra.mxu0 %v375
        %v394 = vpop.f32.mrf.mxu0
        %v395 = vadd.f32 0.0, %v394
        %396 = vdwg.mxu0
        %397 = vst.msk [vmem:[#allocation2] sm:$0xff] %vm334, %v395
        %398 = vrot.lane.b32.xlu0 %v329, 124
        %v399 = vpop.permute.xlu0 %398
        %400 = vrot.lane.b32.xlu0 %v329, 92
        %v401 = vpop.permute.xlu0 %400
        %v402 = vsel %vm334, %v399, 0
        %v404 = vsel %vm334, %v401, 0
        %406 = vmatpush.xpose.msra.mxu0 0.0
        %407 = vmatpush.xpose.msra.mxu0 0.0
        %408 = vmatpush.xpose.msra.mxu0 0.0
        %409 = vmatpush.xpose.msra.mxu0 0.0
        %410 = vmatpush.xpose.msra.mxu0 0.0
        %411 = vmatpush.xpose.msra.mxu0 0.0
        %412 = vmatpush.xpose.msra.mxu0 0.0
        %413 = vmatpush.xpose.msra.mxu0 0.0
        %414 = vmatpush.xpose.msra.mxu0 0.0
        %415 = vmatpush.xpose.msra.mxu0 0.0
        %416 = vmatpush.xpose.msra.mxu0 0.0
        %417 = vmatpush.xpose.msra.mxu0 0.0
        %418 = vmatpush.xpose.msra.mxu0 0.0
        %419 = vmatpush.xpose.msra.mxu0 0.0
        %420 = vmatpush.xpose.msra.mxu0 0.0
        %421 = vmatpush.xpose.msra.mxu0 %v404
        %422 = vmatmul.f32.gmra.mxu0 %v402
        %v423 = vpop.f32.mrf.mxu0
        %v424 = vadd.f32 0.0, %v423
        %425 = vdwg.mxu0
        %v426 = vsel %vm359, %v424, -inf
        %427 = vmax.xlane.f32.xlu0 %v426
        %v428 = vpop.xlane.xlu0 %427
        %v429 = vsub.f32 %v424, %v428
        %v430 = vmul.f32 %v429, 1.442695
        %v431 = vpow.pop %v430
        %v432 = vsel %vm359, %v431, 0.0
        %433 = vadd.xlane.f32.xlu0 %v432
        %v434 = vpop.xlane.xlu0 %433
        %v435 = vrcp.pop %v434
        %v436 = vmul.f32 %v431, %v435
        %437 = vrot.lane.b32.xlu0 %v329, 60
        %v438 = vpop.permute.xlu0 %437
        %v441 = vsel %vm359, %v436, 0
        %443 = vmatpush.msra.mxu0 0.0
        %444 = vmatpush.msra.mxu0 0.0
        %445 = vmatpush.msra.mxu0 0.0
        %446 = vmatpush.msra.mxu0 0.0
        %447 = vmatpush.msra.mxu0 0.0
        %448 = vmatpush.msra.mxu0 0.0
        %449 = vmatpush.msra.mxu0 0.0
        %450 = vmatpush.msra.mxu0 0.0
        %451 = vmatpush.msra.mxu0 0.0
        %452 = vmatpush.msra.mxu0 0.0
        %453 = vmatpush.msra.mxu0 0.0
        %454 = vmatpush.msra.mxu0 0.0
        %455 = vmatpush.msra.mxu0 0.0
        %456 = vmatpush.msra.mxu0 0.0
        %457 = vmatpush.msra.mxu0 0.0
        %458 = vmatpush.msra.mxu0 %v438
        %459 = vmatmul.f32.gmra.mxu0 %v441
        %v460 = vpop.f32.mrf.mxu0
        %v461 = vadd.f32 0.0, %v460
        %462 = vdwg.mxu0
        %464 = vrot.lane.b32.xlu0 %v461, 4
        %v465 = vpop.permute.xlu0 %464
        %vm467 = vcmask 64544
        %468 = vst.msk [vmem:[#allocation2] sm:$0xff] %vm467, %v465
        %469 = vrot.lane.b32.xlu0 %v329, 120
        %v470 = vpop.permute.xlu0 %469
        %471 = vrot.lane.b32.xlu0 %v329, 88
        %v472 = vpop.permute.xlu0 %471
        %v473 = vsel %vm334, %v470, 0
        %v475 = vsel %vm334, %v472, 0
        %477 = vmatpush.xpose.msra.mxu0 0.0
        %478 = vmatpush.xpose.msra.mxu0 0.0
        %479 = vmatpush.xpose.msra.mxu0 0.0
        %480 = vmatpush.xpose.msra.mxu0 0.0
        %481 = vmatpush.xpose.msra.mxu0 0.0
        %482 = vmatpush.xpose.msra.mxu0 0.0
        %483 = vmatpush.xpose.msra.mxu0 0.0
        %484 = vmatpush.xpose.msra.mxu0 0.0
        %485 = vmatpush.xpose.msra.mxu0 0.0
        %486 = vmatpush.xpose.msra.mxu0 0.0
        %487 = vmatpush.xpose.msra.mxu0 0.0
        %488 = vmatpush.xpose.msra.mxu0 0.0
        %489 = vmatpush.xpose.msra.mxu0 0.0
        %490 = vmatpush.xpose.msra.mxu0 0.0
        %491 = vmatpush.xpose.msra.mxu0 0.0
        %492 = vmatpush.xpose.msra.mxu0 %v475
        %493 = vmatmul.f32.gmra.mxu0 %v473
        %v494 = vpop.f32.mrf.mxu0
        %v495 = vadd.f32 0.0, %v494
        %496 = vdwg.mxu0
        %v497 = vsel %vm359, %v495, -inf
        %498 = vmax.xlane.f32.xlu0 %v497
        %v499 = vpop.xlane.xlu0 %498
        %v500 = vsub.f32 %v495, %v499
        %v501 = vmul.f32 %v500, 1.442695
        %v502 = vpow.pop %v501
        %v503 = vsel %vm359, %v502, 0.0
        %504 = vadd.xlane.f32.xlu0 %v503
        %v505 = vpop.xlane.xlu0 %504
        %v506 = vrcp.pop %v505
        %v507 = vmul.f32 %v502, %v506
        %508 = vrot.lane.b32.xlu0 %v329, 56
        %v509 = vpop.permute.xlu0 %508
        %v512 = vsel %vm359, %v507, 0
        %514 = vmatpush.msra.mxu0 0.0
        %515 = vmatpush.msra.mxu0 0.0
        %516 = vmatpush.msra.mxu0 0.0
        %517 = vmatpush.msra.mxu0 0.0
        %518 = vmatpush.msra.mxu0 0.0
        %519 = vmatpush.msra.mxu0 0.0
        %520 = vmatpush.msra.mxu0 0.0
        %521 = vmatpush.msra.mxu0 0.0
        %522 = vmatpush.msra.mxu0 0.0
        %523 = vmatpush.msra.mxu0 0.0
        %524 = vmatpush.msra.mxu0 0.0
        %525 = vmatpush.msra.mxu0 0.0
        %526 = vmatpush.msra.mxu0 0.0
        %527 = vmatpush.msra.mxu0 0.0
        %528 = vmatpush.msra.mxu0 0.0
        %529 = vmatpush.msra.mxu0 %v509
        %530 = vmatmul.f32.gmra.mxu0 %v512
        %v531 = vpop.f32.mrf.mxu0
        %v532 = vadd.f32 0.0, %v531
        %533 = vdwg.mxu0
        %535 = vrot.lane.b32.xlu0 %v532, 8
        %v536 = vpop.permute.xlu0 %535
        %vm538 = vcmask 97344
        %539 = vst.msk [vmem:[#allocation2] sm:$0xff] %vm538, %v536
        %540 = vrot.lane.b32.xlu0 %v329, 116
        %v541 = vpop.permute.xlu0 %540
        %542 = vrot.lane.b32.xlu0 %v329, 84
        %v543 = vpop.permute.xlu0 %542
        %v544 = vsel %vm334, %v541, 0
        %v546 = vsel %vm334, %v543, 0
        %548 = vmatpush.xpose.msra.mxu0 0.0
        %549 = vmatpush.xpose.msra.mxu0 0.0
        %550 = vmatpush.xpose.msra.mxu0 0.0
        %551 = vmatpush.xpose.msra.mxu0 0.0
        %552 = vmatpush.xpose.msra.mxu0 0.0
        %553 = vmatpush.xpose.msra.mxu0 0.0
        %554 = vmatpush.xpose.msra.mxu0 0.0
        %555 = vmatpush.xpose.msra.mxu0 0.0
        %556 = vmatpush.xpose.msra.mxu0 0.0
        %557 = vmatpush.xpose.msra.mxu0 0.0
        %558 = vmatpush.xpose.msra.mxu0 0.0
        %559 = vmatpush.xpose.msra.mxu0 0.0
        %560 = vmatpush.xpose.msra.mxu0 0.0
        %561 = vmatpush.xpose.msra.mxu0 0.0
        %562 = vmatpush.xpose.msra.mxu0 0.0
        %563 = vmatpush.xpose.msra.mxu0 %v546
        %564 = vmatmul.f32.gmra.mxu0 %v544
        %v565 = vpop.f32.mrf.mxu0
        %v566 = vadd.f32 0.0, %v565
        %567 = vdwg.mxu0
        %v568 = vsel %vm359, %v566, -inf
        %569 = vmax.xlane.f32.xlu0 %v568
        %v570 = vpop.xlane.xlu0 %569
        %v571 = vsub.f32 %v566, %v570
        %v572 = vmul.f32 %v571, 1.442695
        %v573 = vpow.pop %v572
        %v574 = vsel %vm359, %v573, 0.0
        %575 = vadd.xlane.f32.xlu0 %v574
        %v576 = vpop.xlane.xlu0 %575
        %v577 = vrcp.pop %v576
        %v578 = vmul.f32 %v573, %v577
        %579 = vrot.lane.b32.xlu0 %v329, 52
        %v580 = vpop.permute.xlu0 %579
        %v583 = vsel %vm359, %v578, 0
        %585 = vmatpush.msra.mxu0 0.0
        %586 = vmatpush.msra.mxu0 0.0
        %587 = vmatpush.msra.mxu0 0.0
        %588 = vmatpush.msra.mxu0 0.0
        %589 = vmatpush.msra.mxu0 0.0
        %590 = vmatpush.msra.mxu0 0.0
        %591 = vmatpush.msra.mxu0 0.0
        %592 = vmatpush.msra.mxu0 0.0
        %593 = vmatpush.msra.mxu0 0.0
        %594 = vmatpush.msra.mxu0 0.0
        %595 = vmatpush.msra.mxu0 0.0
        %596 = vmatpush.msra.mxu0 0.0
        %597 = vmatpush.msra.mxu0 0.0
        %598 = vmatpush.msra.mxu0 0.0
        %599 = vmatpush.msra.mxu0 0.0
        %600 = vmatpush.msra.mxu0 %v580
        %601 = vmatmul.f32.gmra.mxu0 %v583
        %v602 = vpop.f32.mrf.mxu0
        %v603 = vadd.f32 0.0, %v602
        %604 = vdwg.mxu0
        %606 = vrot.lane.b32.xlu0 %v603, 12
        %v607 = vpop.permute.xlu0 %606
        %vm609 = vcmask 130144
        %610 = vst.msk [vmem:[#allocation2] sm:$0xff] %vm609, %v607
        %611 = vrot.lane.b32.xlu0 %v329, 112
        %v612 = vpop.permute.xlu0 %611
        %613 = vrot.lane.b32.xlu0 %v329, 80
        %v614 = vpop.permute.xlu0 %613
        %v615 = vsel %vm334, %v612, 0
        %v617 = vsel %vm334, %v614, 0
        %619 = vmatpush.xpose.msra.mxu0 0.0
        %620 = vmatpush.xpose.msra.mxu0 0.0
        %621 = vmatpush.xpose.msra.mxu0 0.0
        %622 = vmatpush.xpose.msra.mxu0 0.0
        %623 = vmatpush.xpose.msra.mxu0 0.0
        %624 = vmatpush.xpose.msra.mxu0 0.0
        %625 = vmatpush.xpose.msra.mxu0 0.0
        %626 = vmatpush.xpose.msra.mxu0 0.0
        %627 = vmatpush.xpose.msra.mxu0 0.0
        %628 = vmatpush.xpose.msra.mxu0 0.0
        %629 = vmatpush.xpose.msra.mxu0 0.0
        %630 = vmatpush.xpose.msra.mxu0 0.0
        %631 = vmatpush.xpose.msra.mxu0 0.0
        %632 = vmatpush.xpose.msra.mxu0 0.0
        %633 = vmatpush.xpose.msra.mxu0 0.0
        %634 = vmatpush.xpose.msra.mxu0 %v617
        %635 = vmatmul.f32.gmra.mxu0 %v615
        %v636 = vpop.f32.mrf.mxu0
        %v637 = vadd.f32 0.0, %v636
        %638 = vdwg.mxu0
        %v639 = vsel %vm359, %v637, -inf
        %640 = vmax.xlane.f32.xlu0 %v639
        %v641 = vpop.xlane.xlu0 %640
        %v642 = vsub.f32 %v637, %v641
        %v643 = vmul.f32 %v642, 1.442695
        %v644 = vpow.pop %v643
        %v645 = vsel %vm359, %v644, 0.0
        %646 = vadd.xlane.f32.xlu0 %v645
        %v647 = vpop.xlane.xlu0 %646
        %v648 = vrcp.pop %v647
        %v649 = vmul.f32 %v644, %v648
        %650 = vrot.lane.b32.xlu0 %v329, 48
        %v651 = vpop.permute.xlu0 %650
        %v654 = vsel %vm359, %v649, 0
        %656 = vmatpush.msra.mxu0 0.0
        %657 = vmatpush.msra.mxu0 0.0
        %658 = vmatpush.msra.mxu0 0.0
        %659 = vmatpush.msra.mxu0 0.0
        %660 = vmatpush.msra.mxu0 0.0
        %661 = vmatpush.msra.mxu0 0.0
        %662 = vmatpush.msra.mxu0 0.0
        %663 = vmatpush.msra.mxu0 0.0
        %664 = vmatpush.msra.mxu0 0.0
        %665 = vmatpush.msra.mxu0 0.0
        %666 = vmatpush.msra.mxu0 0.0
        %667 = vmatpush.msra.mxu0 0.0
        %668 = vmatpush.msra.mxu0 0.0
        %669 = vmatpush.msra.mxu0 0.0
        %670 = vmatpush.msra.mxu0 0.0
        %671 = vmatpush.msra.mxu0 %v651
        %672 = vmatmul.f32.gmra.mxu0 %v654
        %v673 = vpop.f32.mrf.mxu0
        %v674 = vadd.f32 0.0, %v673
        %675 = vdwg.mxu0
        %677 = vrot.lane.b32.xlu0 %v674, 16
        %v678 = vpop.permute.xlu0 %677
        %vm680 = vcmask 162944
        %681 = vst.msk [vmem:[#allocation2] sm:$0xff] %vm680, %v678
        %682 = vrot.lane.b32.xlu0 %v329, 108
        %v683 = vpop.permute.xlu0 %682
        %684 = vrot.lane.b32.xlu0 %v329, 76
        %v685 = vpop.permute.xlu0 %684
        %v686 = vsel %vm334, %v683, 0
        %v688 = vsel %vm334, %v685, 0
        %690 = vmatpush.xpose.msra.mxu0 0.0
        %691 = vmatpush.xpose.msra.mxu0 0.0
        %692 = vmatpush.xpose.msra.mxu0 0.0
        %693 = vmatpush.xpose.msra.mxu0 0.0
        %694 = vmatpush.xpose.msra.mxu0 0.0
        %695 = vmatpush.xpose.msra.mxu0 0.0
        %696 = vmatpush.xpose.msra.mxu0 0.0
        %697 = vmatpush.xpose.msra.mxu0 0.0
        %698 = vmatpush.xpose.msra.mxu0 0.0
        %699 = vmatpush.xpose.msra.mxu0 0.0
        %700 = vmatpush.xpose.msra.mxu0 0.0
        %701 = vmatpush.xpose.msra.mxu0 0.0
        %702 = vmatpush.xpose.msra.mxu0 0.0
        %703 = vmatpush.xpose.msra.mxu0 0.0
        %704 = vmatpush.xpose.msra.mxu0 0.0
        %705 = vmatpush.xpose.msra.mxu0 %v688
        %706 = vmatmul.f32.gmra.mxu0 %v686
        %v707 = vpop.f32.mrf.mxu0
        %v708 = vadd.f32 0.0, %v707
        %709 = vdwg.mxu0
        %v710 = vsel %vm359, %v708, -inf
        %711 = vmax.xlane.f32.xlu0 %v710
        %v712 = vpop.xlane.xlu0 %711
        %v713 = vsub.f32 %v708, %v712
        %v714 = vmul.f32 %v713, 1.442695
        %v715 = vpow.pop %v714
        %v716 = vsel %vm359, %v715, 0.0
        %717 = vadd.xlane.f32.xlu0 %v716
        %v718 = vpop.xlane.xlu0 %717
        %v719 = vrcp.pop %v718
        %v720 = vmul.f32 %v715, %v719
        %721 = vrot.lane.b32.xlu0 %v329, 44
        %v722 = vpop.permute.xlu0 %721
        %v725 = vsel %vm359, %v720, 0
        %727 = vmatpush.msra.mxu0 0.0
        %728 = vmatpush.msra.mxu0 0.0
        %729 = vmatpush.msra.mxu0 0.0
        %730 = vmatpush.msra.mxu0 0.0
        %731 = vmatpush.msra.mxu0 0.0
        %732 = vmatpush.msra.mxu0 0.0
        %733 = vmatpush.msra.mxu0 0.0
        %734 = vmatpush.msra.mxu0 0.0
        %735 = vmatpush.msra.mxu0 0.0
        %736 = vmatpush.msra.mxu0 0.0
        %737 = vmatpush.msra.mxu0 0.0
        %738 = vmatpush.msra.mxu0 0.0
        %739 = vmatpush.msra.mxu0 0.0
        %740 = vmatpush.msra.mxu0 0.0
        %741 = vmatpush.msra.mxu0 0.0
        %742 = vmatpush.msra.mxu0 %v722
        %743 = vmatmul.f32.gmra.mxu0 %v725
        %v744 = vpop.f32.mrf.mxu0
        %v745 = vadd.f32 0.0, %v744
        %746 = vdwg.mxu0
        %748 = vrot.lane.b32.xlu0 %v745, 20
        %v749 = vpop.permute.xlu0 %748
        %vm751 = vcmask 195744
        %752 = vst.msk [vmem:[#allocation2] sm:$0xff] %vm751, %v749
        %753 = vrot.lane.b32.xlu0 %v329, 104
        %v754 = vpop.permute.xlu0 %753
        %755 = vrot.lane.b32.xlu0 %v329, 72
        %v756 = vpop.permute.xlu0 %755
        %v757 = vsel %vm334, %v754, 0
        %v759 = vsel %vm334, %v756, 0
        %761 = vmatpush.xpose.msra.mxu0 0.0
        %762 = vmatpush.xpose.msra.mxu0 0.0
        %763 = vmatpush.xpose.msra.mxu0 0.0
        %764 = vmatpush.xpose.msra.mxu0 0.0
        %765 = vmatpush.xpose.msra.mxu0 0.0
        %766 = vmatpush.xpose.msra.mxu0 0.0
        %767 = vmatpush.xpose.msra.mxu0 0.0
        %768 = vmatpush.xpose.msra.mxu0 0.0
        %769 = vmatpush.xpose.msra.mxu0 0.0
        %770 = vmatpush.xpose.msra.mxu0 0.0
        %771 = vmatpush.xpose.msra.mxu0 0.0
        %772 = vmatpush.xpose.msra.mxu0 0.0
        %773 = vmatpush.xpose.msra.mxu0 0.0
        %774 = vmatpush.xpose.msra.mxu0 0.0
        %775 = vmatpush.xpose.msra.mxu0 0.0
        %776 = vmatpush.xpose.msra.mxu0 %v759
        %777 = vmatmul.f32.gmra.mxu0 %v757
        %v778 = vpop.f32.mrf.mxu0
        %v779 = vadd.f32 0.0, %v778
        %780 = vdwg.mxu0
        %v781 = vsel %vm359, %v779, -inf
        %782 = vmax.xlane.f32.xlu0 %v781
        %v783 = vpop.xlane.xlu0 %782
        %v784 = vsub.f32 %v779, %v783
        %v785 = vmul.f32 %v784, 1.442695
        %v786 = vpow.pop %v785
        %v787 = vsel %vm359, %v786, 0.0
        %788 = vadd.xlane.f32.xlu0 %v787
        %v789 = vpop.xlane.xlu0 %788
        %v790 = vrcp.pop %v789
        %v791 = vmul.f32 %v786, %v790
        %792 = vrot.lane.b32.xlu0 %v329, 40
        %v793 = vpop.permute.xlu0 %792
        %v796 = vsel %vm359, %v791, 0
        %798 = vmatpush.msra.mxu0 0.0
        %799 = vmatpush.msra.mxu0 0.0
        %800 = vmatpush.msra.mxu0 0.0
        %801 = vmatpush.msra.mxu0 0.0
        %802 = vmatpush.msra.mxu0 0.0
        %803 = vmatpush.msra.mxu0 0.0
        %804 = vmatpush.msra.mxu0 0.0
        %805 = vmatpush.msra.mxu0 0.0
        %806 = vmatpush.msra.mxu0 0.0
        %807 = vmatpush.msra.mxu0 0.0
        %808 = vmatpush.msra.mxu0 0.0
        %809 = vmatpush.msra.mxu0 0.0
        %810 = vmatpush.msra.mxu0 0.0
        %811 = vmatpush.msra.mxu0 0.0
        %812 = vmatpush.msra.mxu0 0.0
        %813 = vmatpush.msra.mxu0 %v793
        %814 = vmatmul.f32.gmra.mxu0 %v796
        %v815 = vpop.f32.mrf.mxu0
        %v816 = vadd.f32 0.0, %v815
        %817 = vdwg.mxu0
        %819 = vrot.lane.b32.xlu0 %v816, 24
        %v820 = vpop.permute.xlu0 %819
        %vm822 = vcmask 228544
        %823 = vst.msk [vmem:[#allocation2] sm:$0xff] %vm822, %v820
        %824 = vrot.lane.b32.xlu0 %v329, 100
        %v825 = vpop.permute.xlu0 %824
        %826 = vrot.lane.b32.xlu0 %v329, 68
        %v827 = vpop.permute.xlu0 %826
        %v828 = vsel %vm334, %v825, 0
        %v830 = vsel %vm334, %v827, 0
        %832 = vmatpush.xpose.msra.mxu0 0.0
        %833 = vmatpush.xpose.msra.mxu0 0.0
        %834 = vmatpush.xpose.msra.mxu0 0.0
        %835 = vmatpush.xpose.msra.mxu0 0.0
        %836 = vmatpush.xpose.msra.mxu0 0.0
        %837 = vmatpush.xpose.msra.mxu0 0.0
        %838 = vmatpush.xpose.msra.mxu0 0.0
        %839 = vmatpush.xpose.msra.mxu0 0.0
        %840 = vmatpush.xpose.msra.mxu0 0.0
        %841 = vmatpush.xpose.msra.mxu0 0.0
        %842 = vmatpush.xpose.msra.mxu0 0.0
        %843 = vmatpush.xpose.msra.mxu0 0.0
        %844 = vmatpush.xpose.msra.mxu0 0.0
        %845 = vmatpush.xpose.msra.mxu0 0.0
        %846 = vmatpush.xpose.msra.mxu0 0.0
        %847 = vmatpush.xpose.msra.mxu0 %v830
        %848 = vmatmul.f32.gmra.mxu0 %v828
        %v849 = vpop.f32.mrf.mxu0
        %v850 = vadd.f32 0.0, %v849
        %851 = vdwg.mxu0
        %v852 = vsel %vm359, %v850, -inf
        %853 = vmax.xlane.f32.xlu0 %v852
        %v854 = vpop.xlane.xlu0 %853
        %v855 = vsub.f32 %v850, %v854
        %v856 = vmul.f32 %v855, 1.442695
        %v857 = vpow.pop %v856
        %v858 = vsel %vm359, %v857, 0.0
        %859 = vadd.xlane.f32.xlu0 %v858
        %v860 = vpop.xlane.xlu0 %859
        %v861 = vrcp.pop %v860
        %v862 = vmul.f32 %v857, %v861
        %863 = vrot.lane.b32.xlu0 %v329, 36
        %v864 = vpop.permute.xlu0 %863
        %v867 = vsel %vm359, %v862, 0
        %869 = vmatpush.msra.mxu0 0.0
        %870 = vmatpush.msra.mxu0 0.0
        %871 = vmatpush.msra.mxu0 0.0
        %872 = vmatpush.msra.mxu0 0.0
        %873 = vmatpush.msra.mxu0 0.0
        %874 = vmatpush.msra.mxu0 0.0
        %875 = vmatpush.msra.mxu0 0.0
        %876 = vmatpush.msra.mxu0 0.0
        %877 = vmatpush.msra.mxu0 0.0
        %878 = vmatpush.msra.mxu0 0.0
        %879 = vmatpush.msra.mxu0 0.0
        %880 = vmatpush.msra.mxu0 0.0
        %881 = vmatpush.msra.mxu0 0.0
        %882 = vmatpush.msra.mxu0 0.0
        %883 = vmatpush.msra.mxu0 0.0
        %884 = vmatpush.msra.mxu0 %v864
        %885 = vmatmul.f32.gmra.mxu0 %v867
        %v886 = vpop.f32.mrf.mxu0
        %v887 = vadd.f32 0.0, %v886
        %888 = vdwg.mxu0
        %890 = vrot.lane.b32.xlu0 %v887, 28
        %v891 = vpop.permute.xlu0 %890
        %vm893 = vcmask 261344
        %894 = vst.msk [vmem:[#allocation2] sm:$0xff] %vm893, %v891
        %v895 = vld [vmem:[#allocation2] sm:$0xff]
        %v896 = vld [vmem:[#allocation8] sm:$0xff]
        %v897 = vld [vmem:[#allocation8 + $0x8] sm:$0xff]
        %v898 = vld [vmem:[#allocation8 + $0x10] sm:$0xff]
        %v899 = vld [vmem:[#allocation8 + $0x18] sm:$0xff]
        %v900 = vld [vmem:[%s3] sm:$0x1]
        %v902 = vperm.slane %v900, 0
        %v905 = vsel %vm307, %v895, 0
        %907 = vmatpush.msra.mxu0 0.0
        %908 = vmatpush.msra.mxu0 0.0
        %909 = vmatpush.msra.mxu0 0.0
        %910 = vmatpush.msra.mxu0 0.0
        %911 = vmatpush.msra.mxu0 0.0
        %912 = vmatpush.msra.mxu0 0.0
        %913 = vmatpush.msra.mxu0 0.0
        %914 = vmatpush.msra.mxu0 0.0
        %915 = vmatpush.msra.mxu0 0.0
        %916 = vmatpush.msra.mxu0 0.0
        %917 = vmatpush.msra.mxu0 0.0
        %918 = vmatpush.msra.mxu0 0.0
        %919 = vmatpush.msra.mxu0 %v899
        %920 = vmatpush.msra.mxu0 %v898
        %921 = vmatpush.msra.mxu0 %v897
        %922 = vmatpush.msra.mxu0 %v896
        %923 = vmatmul.f32.gmra.mxu0 %v905
        %v924 = vpop.f32.mrf.mxu0
        %v925 = vadd.f32 %v902, %v924
        %926 = vdwg.mxu0
        %v927 = vadd.f32 %v925, %v302
        %v928 = vsel %vm307, %v927, 0.0
        %929 = vadd.xlane.f32.xlu0 %v928
        %v930 = vpop.xlane.xlu0 %929
        %v931 = vrcp.pop 32.0
        %v932 = vmul.f32 32.0, %v931
        %v933 = vsub.f32 1.0, %v932
        %v934 = vmul.f32 %v931, %v933
        %v935 = vadd.f32 %v931, %v934
        %vm936 = vweird.f32 %v931
        %v937 = vsel %vm936, %v931, %v935
        %v938 = vmul.f32 %v930, %v937
        %v939 = vsub.f32 %v927, %v938
        %v940 = vmul.f32 %v939, %v939
        %v941 = vsel %vm307, %v940, 0.0
        %942 = vadd.xlane.f32.xlu0 %v941
        %v943 = vpop.xlane.xlu0 %942
        %v944 = vmul.f32 %v943, %v937
        %v945 = vadd.f32 %v944, 1e-05
        %v946 = vrsqrt.pop %v945
        %v947 = vmul.f32 %v946, %v945
        %v948 = vmul.f32 %v947, %v946
        %v949 = vmul.f32 0.5, %v948
        %v950 = vsub.f32 1.5, %v949
        %v951 = vmul.f32 %v946, %v950
        %vm952 = vweird.f32 %v945
        %vm953 = vweird.f32 %v946
        %vm954 = vmor %vm952, %vm953
        %v955 = vsel %vm954, %v946, %v951
        %v956 = vmul.f32 %v939, %v955
        %v957 = vld [vmem:[%s4] sm:$0x1]
        %v959 = vperm.slane %v957, 0
        %v961 = vmul.f32 %v956, %v959
        %v962 = vld [vmem:[%s5] sm:$0x1]
        %v964 = vperm.slane %v962, 0
        %v966 = vadd.f32 %v961, %v964
        %967 = vst.msk [vmem:[%s301] sm:$0xff] %vm307, %v966
        %s968 = sand.u32 %s163, 1
        %s969 = scalar_lea.sflag [#allocation5], %s968
        %s970 = sand.u32 %s163, 1
        %s971 = smul.addr %s970, 8
        %s972 = scalar_lea.vmem [#allocation9], %s971
        // Predicated region
        $region57: #{tpu_custom_call.1} parent=43 // pred_check
          %p973 = pneg %p173
        $region58: #{tpu_custom_call.1} parent=43 // pred_check_branch
          %975 = sbr.rel (%p973) target = $region60
        $region59: #{tpu_custom_call.1} parent=43 // pred_region
          %977 = vsyncadd %s969, 0
          %s978 = smul.addr %s24, 8
          %s979 = scalar_lea.hbm %s6, %s978
          %s981 = sshll.u32 %s972, 4
          %s982 = int_to_ptr.vmem [resolvable:$true] %s981
          %s983 = sshll.u32 %s979, 4
          %s984 = int_to_ptr.hbm [resolvable:$true] %s983
          %986 = dma.vmem_to_hbm [thread:$0]  %s982, 128, %s984, %s969
        $region60: #{tpu_custom_call.1} parent=43 // pred_fallthru
          _
      $region44: #{tpu_custom_call.1} parent=5 // pred_fallthru
        _
      %p987 = scmp.le.s32.totalorder 2, %s19
      // Predicated region
      $region61: #{tpu_custom_call.1} parent=5 // pred_check
        %p988 = pneg %p987
      $region62: #{tpu_custom_call.1} parent=5 // pred_check_branch
        %990 = sbr.rel (%p988) target = $region64
      $region63: #{tpu_custom_call.1} parent=5 // pred_region
        %s991 = ssub.s32 %s19, 2
        // Predicated region
        $region65: #{tpu_custom_call.1} parent=63 // pred_check
          %p992 = pneg %p179
        $region66: #{tpu_custom_call.1} parent=63 // pred_check_branch
          %994 = sbr.rel (%p992) target = $region68
        $region67: #{tpu_custom_call.1} parent=63 // pred_region
          %s995 = sand.u32 %s164, 1
          %s996 = scalar_lea.sflag [#allocation5], %s995
          %s997 = sand.u32 %s164, 1
          %s998 = smul.addr %s997, 8
          %s999 = scalar_lea.vmem [#allocation9], %s998
          %1001 = dma.done %s996, 128
        $region68: #{tpu_custom_call.1} parent=63 // pred_fallthru
          _
      $region64: #{tpu_custom_call.1} parent=5 // pred_fallthru
        _
    $region6: #{tpu_custom_call.1} parent=1 // loop_footer
      %s23 = sadd.s32 1, %s19
    $region7: #{tpu_custom_call.1} parent=1 // loop_footer_branch
      %18 = sbr.rel target = $region3
    $region8: #{tpu_custom_call.1} parent=1 // loop_exit
      _
    %1002 = vsyncpa [#allocation4], 1
    %s1003 = scalar_lea.sflag [#allocation4], 1
    %1004 = vsyncpa %s1003, 1
    %1005 = vsyncpa [#allocation7], 1
    %1006 = vsyncpa [#allocation5], 1
    %s1007 = scalar_lea.sflag [#allocation5], 1
    %1008 = vsyncpa %s1007, 1

</llo_original>
